<compile_context>
chip_gen: v7x
topology: tpu7x:2x2x1
jax: 0.10.0
libtpu: 0.0.40
codegen_flags: <defaults>
</compile_context>

<pallas_src>
import math
import functools

import jax
import jax.numpy as jnp
from jax.experimental import pallas as pl
from jax.experimental.pallas import tpu as pltpu


def _round_up(v, mult):
    return ((v + mult - 1) // mult) * mult


def _cdiv(a, b):
    return (a + b - 1) // b


_VMEM_BUDGET = 28 * 1024 * 1024   # tile working-set budget (double-buffered)
_VMEM_LIMIT = 48 * 1024 * 1024    # scoped VMEM limit requested from Mosaic (< v7x 64 MiB)
_K_TILE_THRESHOLD = 2048          # above this in_dim, tile the contraction axis
_STEP_OVERHEAD_ROWS = 64          # ~0.35us fixed per-grid-step cost, in row units


# ----------------------------------------------------------------------------
# Kernels
# ----------------------------------------------------------------------------
def _siren_kernel(x_ref, w_ref, b_ref, o_ref, *, compute_dtype):
    # x_ref: (tm, K) f32 | w_ref: (K, tn) compute_dtype (w0 folded in)
    # b_ref: (1, tn) f32 (w0 folded in) | o_ref: (tm, tn) block of (m, out_dim)
    x = x_ref[...].astype(compute_dtype)   # in-kernel cast: x streams HBM once (f32)
    acc = jnp.dot(x, w_ref[...], preferred_element_type=jnp.float32)
    o_ref[...] = jnp.sin(acc + b_ref[...]).astype(o_ref.dtype)


def _siren_kernel_ktiled(x_ref, w_ref, b_ref, o_ref, acc_ref, *, compute_dtype):
    # Large-K path: accumulate over the "arbitrary" K grid axis in f32 scratch.
    k = pl.program_id(2)

    @pl.when(k == 0)
    def _():
        acc_ref[...] = jnp.zeros_like(acc_ref)

    x = x_ref[...].astype(compute_dtype)
    acc_ref[...] += jnp.dot(x, w_ref[...], preferred_element_type=jnp.float32)

    @pl.when(k == pl.num_programs(2) - 1)
    def _():
        o_ref[...] = jnp.sin(acc_ref[...] + b_ref[...]).astype(o_ref.dtype)


# ----------------------------------------------------------------------------
# Tile selection helpers (all static Python, trace-time only)
# ----------------------------------------------------------------------------
def _pick_row_tile(m_rows, cap):
    """Largest row tile (multiple of 8, <= cap) minimizing computed rows
    (including ragged-tile overhang) plus per-grid-step overhead."""
    cap = max(8, cap - cap % 8)
    best_tm, best_cost = 8, None
    tm = cap
    while tm >= 8:
        steps = _cdiv(m_rows, tm)
        cost = steps * tm + steps * _STEP_OVERHEAD_ROWS
        if best_cost is None or cost < best_cost:
            best_tm, best_cost = tm, cost
        tm -= 8
    return best_tm


def _pick_col_tile(n_aligned, k, w_itemsize):
    # Resident W: a single column tile -> W is DMA'd exactly once.
    if 2 * k * n_aligned * w_itemsize <= 8 * 1024 * 1024:
        return n_aligned
    # Otherwise 256-multiples (fills the 256x256 MXU on v6e/v7x), minimal waste.
    best_tn, best_cost = 256, None
    for tn in (768, 512, 256):
        padded = _round_up(n_aligned, tn)
        cost = padded + (padded // tn) * 32
        if best_cost is None or cost < best_cost:
            best_tn, best_cost = tn, cost
    return best_tn


def _pick_k_tile(k, tk_max=2048):
    cap = min(tk_max, k)
    cap = max(128, cap - cap % 128)
    best_tk, best_cost = cap, None
    for tk in range(cap, 127, -128):
        padded = _round_up(k, tk)
        cost = padded + (padded // tk) * 32
        if best_cost is None or cost < best_cost:
            best_tk, best_cost = tk, cost
    return best_tk


# ----------------------------------------------------------------------------
# Forward
# ----------------------------------------------------------------------------
def siren_forward(x, weight, bias=None, w0=1.0, *,
                  compute_dtype=jnp.bfloat16, out_dtype=None, tm_max=1024):
    """Siren forward: sin(w0 * (x @ W^T + b)).  Dropout(p=0.0) is identity.

    x: (..., in_dim)   weight: (out_dim, in_dim)   bias: (out_dim,) or None
    compute_dtype: MXU operand dtype (bf16 default; pass jnp.float32 for
    precision-sensitive first layers).  Accumulation is always f32.
    out_dtype: output dtype (defaults to x.dtype; pass bf16 to halve output traffic).
    """
    *lead, in_dim = x.shape
    out_dim = weight.shape[0]
    if out_dtype is None:
        out_dtype = x.dtype
    m = 1
    for d in lead:
        m *= d
    x2d = x.reshape(m, in_dim)              # no cast, no pad: single HBM read of x
    if bias is None:
        bias = jnp.zeros((out_dim,), jnp.float32)

    # Fold w0 into the (tiny) weights / bias once -> kernel is just sin(x@W + b).
    w_eff = (w0 * weight.astype(jnp.float32)).T.astype(compute_dtype)   # (K, N)
    b_eff = (w0 * bias.astype(jnp.float32)).reshape(1, out_dim)

    w_itemsize = jnp.dtype(compute_dtype).itemsize
    o_itemsize = jnp.dtype(out_dtype).itemsize
    x_itemsize = jnp.dtype(x2d.dtype).itemsize

    n_aligned = _round_up(out_dim, 128)     # lane-dense W / bias slabs
    m_aligned = _round_up(m, 8)

    if in_dim <= _K_TILE_THRESHOLD:
        # ----------------------- un-tiled-K path -----------------------------
        tn = _pick_col_tile(n_aligned, in_dim, w_itemsize)
        n_tiles = _cdiv(out_dim, tn)
        n_wb = n_tiles * tn                 # pad only the tiny W / bias slabs

        def _fits(tm):
            return (2 * tm * in_dim * x_itemsize      # x tile, double-buffered
                    + 2 * in_dim * tn * w_itemsize    # W slab, double-buffered
                    + 2 * tm * tn * o_itemsize        # out tile, double-buffered
                    + 2 * tn * 4) <= _VMEM_BUDGET     # bias

        tm_cap = max(8, min(tm_max, m_aligned))
        tm_cap -= tm_cap % 8
        while tm_cap > 8 and not _fits(tm_cap):
            tm_cap -= 8
        if m_aligned > 8:                    # keep >=2 row tiles for v7x's 2 TCs
            tm_cap = min(tm_cap, _round_up(_cdiv(m_aligned, 2), 8))
        tm = _pick_row_tile(m, tm_cap)
        m_tiles = _cdiv(m, tm)

        w_p = w_eff if n_wb == out_dim else jnp.pad(w_eff, ((0, 0), (0, n_wb - out_dim)))
        b_p = b_eff if n_wb == out_dim else jnp.pad(b_eff, ((0, 0), (0, n_wb - out_dim)))

        cost = pl.CostEstimate(
            flops=2 * (m_tiles * tm) * in_dim * n_wb,
            transcendentals=(m_tiles * tm) * n_wb,
            bytes_accessed=(m * in_dim * x_itemsize
                            + in_dim * n_wb * w_itemsize * (1 if n_tiles == 1 else m_tiles)
                            + n_wb * 4
                            + m * out_dim * o_itemsize),
        )

        out2d = pl.pallas_call(
            functools.partial(_siren_kernel, compute_dtype=compute_dtype),
            out_shape=jax.ShapeDtypeStruct((m, out_dim), out_dtype),
            grid_spec=pltpu.PrefetchScalarGridSpec(
                num_scalar_prefetch=0,
                grid=(m_tiles, n_tiles),
                in_specs=[
                    # x block constant across j -> big operand stays resident.
                    pl.BlockSpec((tm, in_dim), lambda i, j: (i, 0)),
                    # single column tile (common case) -> W DMA'd exactly once.
                    pl.BlockSpec((in_dim, tn), lambda i, j: (0, j)),
                    pl.BlockSpec((1, tn), lambda i, j: (0, j)),
                ],
                out_specs=pl.BlockSpec((tm, tn), lambda i, j: (i, j)),
            ),
            compiler_params=pltpu.CompilerParams(
                dimension_semantics=("parallel", "parallel"),
                vmem_limit_bytes=_VMEM_LIMIT,
            ),
            cost_estimate=cost,
        )(x2d, w_p, b_p)
    else:
        # ------------------- K-tiled fallback (large in_dim) ------------------
        tk = _pick_k_tile(in_dim)
        k_pad = _round_up(in_dim, tk)
        tn = min(512, n_aligned)
        n_tiles = _cdiv(out_dim, tn)
        n_wb = n_tiles * tn

        def _fits(tm):
            return (2 * tm * tk * x_itemsize
                    + 2 * tk * tn * w_itemsize
                    + 2 * tm * tn * o_itemsize
                    + tm * tn * 4              # f32 accumulator scratch
                    + 2 * tn * 4) <= _VMEM_BUDGET

        tm_cap = max(8, min(tm_max, m_aligned))
        tm_cap -= tm_cap % 8
        while tm_cap > 8 and not _fits(tm_cap):
            tm_cap -= 8
        if m_aligned > 8:
            tm_cap = min(tm_cap, _round_up(_cdiv(m_aligned, 2), 8))
        tm = _pick_row_tile(m, tm_cap)
        m_tiles = _cdiv(m, tm)
        k_tiles = k_pad // tk

        # Zero K-padding is exact (zero columns/rows contribute nothing).
        x_p = x2d if k_pad == in_dim else jnp.pad(x2d, ((0, 0), (0, k_pad - in_dim)))
        w_p = jnp.pad(w_eff, ((0, k_pad - in_dim), (0, n_wb - out_dim)))
        b_p = b_eff if n_wb == out_dim else jnp.pad(b_eff, ((0, 0), (0, n_wb - out_dim)))

        cost = pl.CostEstimate(
            flops=2 * (m_tiles * tm) * k_pad * n_wb,
            transcendentals=(m_tiles * tm) * n_wb,
            bytes_accessed=(m * k_pad * x_itemsize * n_tiles
                            + k_pad * n_wb * w_itemsize * m_tiles
                            + n_wb * 4
                            + m * out_dim * o_itemsize),
        )

        out2d = pl.pallas_call(
            functools.partial(_siren_kernel_ktiled, compute_dtype=compute_dtype),
            out_shape=jax.ShapeDtypeStruct((m, out_dim), out_dtype),
            grid_spec=pltpu.PrefetchScalarGridSpec(
                num_scalar_prefetch=0,
                grid=(m_tiles, n_tiles, k_tiles),
                in_specs=[
                    pl.BlockSpec((tm, tk), lambda i, j, k: (i, k)),
                    pl.BlockSpec((tk, tn), lambda i, j, k: (k, j)),
                    pl.BlockSpec((1, tn), lambda i, j, k: (0, j)),
                ],
                out_specs=pl.BlockSpec((tm, tn), lambda i, j, k: (i, j)),
                scratch_shapes=[pltpu.VMEM((tm, tn), jnp.float32)],
            ),
            compiler_params=pltpu.CompilerParams(
                dimension_semantics=("parallel", "parallel", "arbitrary"),
                vmem_limit_bytes=_VMEM_LIMIT,
            ),
            cost_estimate=cost,
        )(x_p, w_p, b_p)

    return out2d.reshape(*lead, out_dim)


def init_siren_params(key, in_dim, out_dim, w0=1.0, c=6.0, is_first=False):
    # Matches Siren.init_: uniform(-w_std, w_std)
    w_std = (1.0 / in_dim) if is_first else (math.sqrt(c / in_dim) / w0)
    kw, kb = jax.random.split(key)
    weight = jax.random.uniform(
        kw, (out_dim, in_dim), jnp.float32, minval=-w_std, maxval=w_std
    )
    bias = jax.random.uniform(
        kb, (out_dim,), jnp.float32, minval=-w_std, maxval=w_std
    )
    return weight, bias


if __name__ == "__main__":
    key = jax.random.PRNGKey(0)
    k_x, k_p, k_x2, k_p2 = jax.random.split(key, 4)

    # --- test 1: module-like small shape (batch=2, seq=8, hidden=32) ----------
    batch, seq, in_dim, out_dim = 2, 8, 32, 32
    w0 = 1.0
    x = jax.random.normal(k_x, (batch, seq, in_dim), jnp.float32)
    weight, bias = init_siren_params(k_p, in_dim, out_dim, w0=w0, c=6.0, is_first=False)

    out = siren_forward(x, weight, bias, w0=w0)
    jax.block_until_ready(out)
    ref = jnp.sin(w0 * (x @ weight.T + bias))
    assert out.shape == (batch, seq, out_dim)
    assert jnp.allclose(out, ref, atol=2e-2, rtol=2e-2), float(jnp.max(jnp.abs(out - ref)))

    # --- test 2: f32 compute path (precision-sensitive first layer) -----------
    out_f32 = siren_forward(x, weight, bias, w0=w0, compute_dtype=jnp.float32)
    jax.block_until_ready(out_f32)
    assert jnp.allclose(out_f32, ref, atol=1e-5, rtol=1e-5), float(
        jnp.max(jnp.abs(out_f32 - ref))
    )

    # --- test 3: ragged rows / non-128 out_dim (masked overhang, no pad/slice) -
    b2, s2, in2, out2 = 3, 5, 32, 40
    x2 = jax.random.normal(k_x2, (b2, s2, in2), jnp.float32)
    w2, bias2 = init_siren_params(k_p2, in2, out2, w0=w0, c=6.0, is_first=False)
    o2 = siren_forward(x2, w2, bias2, w0=w0)
    jax.block_until_ready(o2)
    ref2 = jnp.sin(w0 * (x2 @ w2.T + bias2))
    assert o2.shape == (b2, s2, out2)
    assert jnp.allclose(o2, ref2, atol=2e-2, rtol=2e-2), float(jnp.max(jnp.abs(o2 - ref2)))

    print("KERNEL_OK")
</pallas_src>

<mosaic_0001>
module attributes {stable_mosaic.version = 11 : i64} {
  func.func @_siren_kernel(%arg0: i32, %arg1: i32, %arg2: memref<8x32xf32, #tpu.memory_space<vmem>>, %arg3: memref<32x128xbf16, #tpu.memory_space<vmem>>, %arg4: memref<1x128xf32, #tpu.memory_space<vmem>>, %arg5: memref<8x128xf32, #tpu.memory_space<vmem>>) attributes {dimension_semantics = [#tpu.dimension_semantics<parallel>, #tpu.dimension_semantics<parallel>], iteration_bounds = array<i64: 2, 1>, scalar_prefetch = 0 : i64, scratch_operands = 0 : i64, tpu.core_type = #tpu.core_type<tc>, window_params = [{transform_indices = @transform_0, window_bounds = array<i64: 8, 32>}, {transform_indices = @transform_1, window_bounds = array<i64: 32, 128>}, {transform_indices = @transform_2, window_bounds = array<i64: 1, 128>}, {transform_indices = @transform_3, window_bounds = array<i64: 8, 128>}]} {
    %c0 = arith.constant 0 : index
    %c0_0 = arith.constant 0 : index
    %0 = vector.load %arg2[%c0, %c0_0] : memref<8x32xf32, #tpu.memory_space<vmem>>, vector<8x32xf32>
    %1 = arith.truncf %0 : vector<8x32xf32> to vector<8x32xbf16>
    %c0_1 = arith.constant 0 : index
    %c0_2 = arith.constant 0 : index
    %2 = vector.load %arg3[%c0_1, %c0_2] : memref<32x128xbf16, #tpu.memory_space<vmem>>, vector<32x128xbf16>
    %cst = arith.constant dense<0.000000e+00> : vector<8x128xf32>
    %3 = tpu.matmul %1, %2, %cst {dimension_numbers = #tpu.dot_dimension_numbers<[1], [0], [0], [1], [0, 0, 1, 1], [], []>} : vector<8x32xbf16>, vector<32x128xbf16>, vector<8x128xf32> -> vector<8x128xf32>
    %c0_3 = arith.constant 0 : index
    %c0_4 = arith.constant 0 : index
    %4 = vector.load %arg4[%c0_3, %c0_4] : memref<1x128xf32, #tpu.memory_space<vmem>>, vector<1x128xf32>
    %5 = vector.broadcast %4 : vector<1x128xf32> to vector<8x128xf32>
    %6 = arith.addf %3, %5 : vector<8x128xf32>
    %7 = math.sin %6 : vector<8x128xf32>
    %c0_5 = arith.constant 0 : index
    %c0_6 = arith.constant 0 : index
    %8 = vector.load %arg5[%c0_5, %c0_6] : memref<8x128xf32, #tpu.memory_space<vmem>>, vector<8x128xf32>
    tpu.vector_store %arg5[%c0_5, %c0_6], %7 {strides = array<i32>} : memref<8x128xf32, #tpu.memory_space<vmem>>, vector<8x128xf32>,
    return
  }
  func.func @transform_0(%arg0: i32, %arg1: i32) -> (i32, i32) {
    %c0_i32 = arith.constant 0 : i32
    %c0_i32_0 = arith.constant 0 : i32
    return %arg0, %c0_i32 : i32, i32
  }
  func.func @transform_1(%arg0: i32, %arg1: i32) -> (i32, i32) {
    %c0_i32 = arith.constant 0 : i32
    %c0_i32_0 = arith.constant 0 : i32
    return %c0_i32, %arg1 : i32, i32
  }
  func.func @transform_2(%arg0: i32, %arg1: i32) -> (i32, i32) {
    %c0_i32 = arith.constant 0 : i32
    %c0_i32_0 = arith.constant 0 : i32
    return %c0_i32, %arg1 : i32, i32
  }
  func.func @transform_3(%arg0: i32, %arg1: i32) -> (i32, i32) {
    %c0_i32 = arith.constant 0 : i32
    return %arg0, %arg1 : i32, i32
  }
}

</mosaic_0001>

<llo_original>
// kernel: tpu_custom_call.1
$region0: #{tpu_custom_call.1}
  #allocation0 [shape = 'u32[]', space=smem, size = 0x4, offset = 0x4, fixed_abs, tag = 'smem constant byte address 0x4 - core index']
  #allocation1 [shape = 'u32[144,128]{1,0:T(1,128)}', space=vmem, size = 0x12000, scoped, tag = 'internal scratch']
  %s0 = inlined_call_operand.hbm [shape: f32[16,32], index: 0, kind: input, shape index: {}]
  %s1 = inlined_call_operand.hbm [shape: bf16[32,128], index: 1, kind: input, shape index: {}]
  %s2 = inlined_call_operand.vmem [shape: f32[1,128], index: 2, kind: input, shape index: {}]
  %s3 = inlined_call_operand.hbm [shape: f32[16,32], index: 3, kind: output, shape index: {}]
  %s4 = sld [smem:[#allocation0]]
  $region53: #{tpu_custom_call.1} parent=0
    _
  %s6 = ssub.s32 1, %s4
  %s7 = scalar_select 0, %s6, %s4
  $region1: #{tpu_custom_call.1} parent=0
    #allocation2 [shape = 'u8[8192]{0}', space=vmem, size = 0x2000, scoped, tag = 'input window, operand 0']
    #allocation3 [shape = 's32[2]{0}', space=sflag, size = 0x8, scoped, tag = 'scoped memory for tpu_custom_call.1']
    #allocation4 [shape = 's32[2]{0}', space=sflag, size = 0x8, scoped, tag = 'scoped memory for tpu_custom_call.1']
    #allocation5 [shape = 'u8[8192]{0}', space=vmem, size = 0x2000, scoped, tag = 'input window, operand 1, single buffered']
    #allocation6 [shape = 's32[1]{0}', space=sflag, size = 0x4, scoped, tag = 'scoped memory for tpu_custom_call.1']
    #allocation7 [shape = 'u8[8192]{0}', space=vmem, size = 0x2000, scoped, tag = 'output window, operand 0']
    %8 = vsyncpa [#allocation3], 0
    %s9 = scalar_lea.sflag [#allocation3], 1
    %10 = vsyncpa %s9, 0
    %11 = vsyncpa [#allocation6], 0
    %12 = vsyncpa [#allocation4], 0
    %s13 = scalar_lea.sflag [#allocation4], 1
    %14 = vsyncpa %s13, 0
    loop: start=0, step=1, limit=4
    $region2: #{tpu_custom_call.1} parent=1 // loop_pre_header
      _
    $region3: #{tpu_custom_call.1} parent=1 // loop_header
      %s16 = sphi 0, %s20
      %p17 = scmp.ge.s32.totalorder %s16, 4
      %s23 = sphi 0, %s35
      %s24 = sphi 0, %s31
      %s25 = sphi 0, %s23
      %s26 = sphi 0, %s24
      %s27 = sphi 0, %s25
      %s28 = sphi 0, %s26
      %s38 = sphi 0, %s40
      %s41 = sphi 0, %s38
      %s42 = sphi 0, %s41
      %s58 = sphi 0, %s42
      %s64 = sphi 0, %s66
      %s67 = sphi 0, %s64
      %s68 = sphi 0, %s67
      %s84 = sphi 0, %s68
      %s90 = sphi 0, %s92
      %s93 = sphi 0, %s90
      %s94 = sphi 0, %s93
      %s110 = sphi 0, %s94
      %s118 = sphi 0, %s120
      %s121 = sphi 0, %s118
      %s122 = sphi 0, %s121
      %s138 = sphi 0, %s122
    $region4: #{tpu_custom_call.1} parent=1 // loop_header_branch
      %19 = sbr.rel (%p17) target = $region8
    $region5: #{tpu_custom_call.1} parent=1 // loop_body
      %s21 = ssub.s32 %s16, 1
      %s22 = ssub.s32 %s16, 2
      %s29 = sadd.s32 1, %s24
      %p30 = scmp.ge.s32.totalorder %s29, 1
      %s31 = scalar_select %p30, 0, %s29
      %s32 = sadd.s32 1, %s23
      %s33 = scalar_select %p30, %s32, %s23
      %p34 = scmp.ge.s32.totalorder %s33, 2
      %s35 = scalar_select %p34, 0, %s33
      %s36 = ssub.s32 %s23, %s35
      %p37 = scmp.eq.s32.totalorder %s36, 0
      %s39 = sadd.s32 %s38, 1
      %s40 = scalar_select %p37, %s38, %s39
      %p43 = pneg %p37
      %p44 = scmp.eq.s32.totalorder %s16, 1
      %p45 = por %p43, %p44
      %p46 = scmp.ne.s32.totalorder %s38, %s41
      %p47 = scmp.eq.s32.totalorder %s16, 0
      %p48 = por %p46, %p47
      %p49 = scmp.ne.s32.totalorder %s38, %s41
      %p50 = scmp.eq.s32.totalorder %s21, 1
      %p51 = por %p49, %p50
      %p52 = scmp.ne.s32.totalorder %s41, %s42
      %p53 = scmp.eq.s32.totalorder %s21, 0
      %p54 = por %p52, %p53
      %p55 = scmp.ne.s32.totalorder %s41, %s42
      %p56 = scmp.eq.s32.totalorder %s22, 1
      %p57 = por %p55, %p56
      %p59 = scmp.ne.s32.totalorder %s42, %s58
      %p60 = scmp.eq.s32.totalorder %s22, 0
      %p61 = por %p59, %p60
      %s62 = ssub.s32 %s24, %s31
      %p63 = scmp.eq.s32.totalorder %s62, 0
      %s65 = sadd.s32 %s64, 1
      %s66 = scalar_select %p63, %s64, %s65
      %p69 = pneg %p63
      %p70 = scmp.eq.s32.totalorder %s16, 1
      %p71 = por %p69, %p70
      %p72 = scmp.ne.s32.totalorder %s64, %s67
      %p73 = scmp.eq.s32.totalorder %s16, 0
      %p74 = por %p72, %p73
      %p75 = scmp.ne.s32.totalorder %s64, %s67
      %p76 = scmp.eq.s32.totalorder %s21, 1
      %p77 = por %p75, %p76
      %p78 = scmp.ne.s32.totalorder %s67, %s68
      %p79 = scmp.eq.s32.totalorder %s21, 0
      %p80 = por %p78, %p79
      %p81 = scmp.ne.s32.totalorder %s67, %s68
      %p82 = scmp.eq.s32.totalorder %s22, 1
      %p83 = por %p81, %p82
      %p85 = scmp.ne.s32.totalorder %s68, %s84
      %p86 = scmp.eq.s32.totalorder %s22, 0
      %p87 = por %p85, %p86
      %s88 = ssub.s32 %s24, %s31
      %p89 = scmp.eq.s32.totalorder %s88, 0
      %s91 = sadd.s32 %s90, 1
      %s92 = scalar_select %p89, %s90, %s91
      %p95 = pneg %p89
      %p96 = scmp.eq.s32.totalorder %s16, 1
      %p97 = por %p95, %p96
      %p98 = scmp.ne.s32.totalorder %s90, %s93
      %p99 = scmp.eq.s32.totalorder %s16, 0
      %p100 = por %p98, %p99
      %p101 = scmp.ne.s32.totalorder %s90, %s93
      %p102 = scmp.eq.s32.totalorder %s21, 1
      %p103 = por %p101, %p102
      %p104 = scmp.ne.s32.totalorder %s93, %s94
      %p105 = scmp.eq.s32.totalorder %s21, 0
      %p106 = por %p104, %p105
      %p107 = scmp.ne.s32.totalorder %s93, %s94
      %p108 = scmp.eq.s32.totalorder %s22, 1
      %p109 = por %p107, %p108
      %p111 = scmp.ne.s32.totalorder %s94, %s110
      %p112 = scmp.eq.s32.totalorder %s22, 0
      %p113 = por %p111, %p112
      %s114 = ssub.s32 %s23, %s35
      %s115 = ssub.s32 %s24, %s31
      %s116 = sor.u32 %s114, %s115
      %p117 = scmp.eq.s32.totalorder %s116, 0
      %s119 = sadd.s32 %s118, 1
      %s120 = scalar_select %p117, %s118, %s119
      %p123 = pneg %p117
      %p124 = scmp.eq.s32.totalorder %s16, 1
      %p125 = por %p123, %p124
      %p126 = scmp.ne.s32.totalorder %s118, %s121
      %p127 = scmp.eq.s32.totalorder %s16, 0
      %p128 = por %p126, %p127
      %p129 = scmp.ne.s32.totalorder %s118, %s121
      %p130 = scmp.eq.s32.totalorder %s21, 1
      %p131 = por %p129, %p130
      %p132 = scmp.ne.s32.totalorder %s121, %s122
      %p133 = scmp.eq.s32.totalorder %s21, 0
      %p134 = por %p132, %p133
      %p135 = scmp.ne.s32.totalorder %s121, %s122
      %p136 = scmp.eq.s32.totalorder %s22, 1
      %p137 = por %p135, %p136
      %p139 = scmp.ne.s32.totalorder %s122, %s138
      %p140 = scmp.eq.s32.totalorder %s22, 0
      %p141 = por %p139, %p140
      %p142 = scmp.le.s32.totalorder 1, %s16
      %p143 = scmp.lt.s32.totalorder %s16, 3
      %p144 = pnand %p142, %p143
      %p145 = pneg %p144
      // Predicated region
      $region9: #{tpu_custom_call.1} parent=5 // pred_check
        _
      $region10: #{tpu_custom_call.1} parent=5 // pred_check_branch
        %147 = sbr.rel (%p144) target = $region12
      $region11: #{tpu_custom_call.1} parent=5 // pred_region
        %s148 = ssub.s32 %s16, 1
        // Predicated region
        $region13: #{tpu_custom_call.1} parent=11 // pred_check
          %p149 = pneg %p80
        $region14: #{tpu_custom_call.1} parent=11 // pred_check_branch
          %151 = sbr.rel (%p149) target = $region16
        $region15: #{tpu_custom_call.1} parent=11 // pred_region
          %s153 = ssub.s32 256, 256
          %154 = vsyncadd [#allocation6], %s153
          %s155 = smul.addr %s26, 64
          %s156 = scalar_lea.hbm %s1, %s155
          %s157 = sshll.u32 [#allocation5], 4
          %s158 = int_to_ptr.vmem [resolvable:$true] %s157
          %163 = dma.hbm_to_vmem [thread:$0]  %s156, 256, %s158, [#allocation6], 64, 64, 4
        $region16: #{tpu_custom_call.1} parent=11 // pred_fallthru
          _
        // Predicated region
        $region17: #{tpu_custom_call.1} parent=11 // pred_check
          %p164 = pneg %p106
        $region18: #{tpu_custom_call.1} parent=11 // pred_check_branch
          %166 = sbr.rel (%p164) target = $region20
        $region19: #{tpu_custom_call.1} parent=11 // pred_region
          %p167 = scmp.lt.s32.totalorder %s26, 0
          %s168 = scalar_select %p167, %s26, 0
          %s169 = scalar_lea.vmem %s2, %s168
        $region20: #{tpu_custom_call.1} parent=11 // pred_fallthru
          _
      $region12: #{tpu_custom_call.1} parent=5 // pred_fallthru
        _
      %p170 = scmp.lt.s32.totalorder %s16, 2
      // Predicated region
      $region21: #{tpu_custom_call.1} parent=5 // pred_check
        %p171 = pneg %p170
      $region22: #{tpu_custom_call.1} parent=5 // pred_check_branch
        %173 = sbr.rel (%p171) target = $region24
      $region23: #{tpu_custom_call.1} parent=5 // pred_region
        // Predicated region
        $region25: #{tpu_custom_call.1} parent=23 // pred_check
          %p174 = pneg %p48
        $region26: #{tpu_custom_call.1} parent=23 // pred_check_branch
          %176 = sbr.rel (%p174) target = $region28
        $region27: #{tpu_custom_call.1} parent=23 // pred_region
          %s177 = sand.u32 %s38, 1
          %s178 = scalar_lea.sflag [#allocation3], %s177
          %s179 = sand.u32 %s38, 1
          %s180 = smul.addr %s179, 8
          %s181 = scalar_lea.vmem [#allocation2], %s180
          %s183 = ssub.s32 128, 128
          %184 = vsyncadd %s178, %s183
          %s185 = smul.addr %s23, 128
          %s186 = scalar_lea.hbm %s0, %s185
          %s188 = sshll.u32 %s181, 4
          %s189 = int_to_ptr.vmem [resolvable:$true] %s188
          %191 = dma.hbm_to_vmem [thread:$0]  %s186, 128, %s189, %s178
        $region28: #{tpu_custom_call.1} parent=23 // pred_fallthru
          _
      $region24: #{tpu_custom_call.1} parent=5 // pred_fallthru
        _
      %p192 = scmp.le.s32.totalorder 1, %s16
      %p193 = scmp.lt.s32.totalorder %s16, 3
      %p194 = pnand %p192, %p193
      %p195 = pneg %p194
      // Predicated region
      $region29: #{tpu_custom_call.1} parent=5 // pred_check
        _
      $region30: #{tpu_custom_call.1} parent=5 // pred_check_branch
        %197 = sbr.rel (%p194) target = $region32
      $region31: #{tpu_custom_call.1} parent=5 // pred_region
        %s198 = ssub.s32 %s16, 1
        %s199 = sand.u32 %s41, 1
        %s200 = scalar_lea.sflag [#allocation3], %s199
        %s201 = sand.u32 %s41, 1
        %s202 = smul.addr %s201, 8
        %s203 = scalar_lea.vmem [#allocation2], %s202
        // Predicated region
        $region33: #{tpu_custom_call.1} parent=31 // pred_check
          %p204 = pneg %p54
        $region34: #{tpu_custom_call.1} parent=31 // pred_check_branch
          %206 = sbr.rel (%p204) target = $region36
        $region35: #{tpu_custom_call.1} parent=31 // pred_region
          %207 = dma.done %s200, 128
        $region36: #{tpu_custom_call.1} parent=31 // pred_fallthru
          _
        // Predicated region
        $region37: #{tpu_custom_call.1} parent=31 // pred_check
          %p208 = pneg %p80
        $region38: #{tpu_custom_call.1} parent=31 // pred_check_branch
          %210 = sbr.rel (%p208) target = $region40
        $region39: #{tpu_custom_call.1} parent=31 // pred_region
          %211 = dma.done [#allocation6], 256
        $region40: #{tpu_custom_call.1} parent=31 // pred_fallthru
          _
        %s212 = sand.u32 %s41, 1
        %s213 = scalar_lea.sflag [#allocation3], %s212
        %s214 = sand.u32 %s41, 1
        %s215 = smul.addr %s214, 8
        %s216 = scalar_lea.vmem [#allocation2], %s215
        %p217 = pneg %p54
        %p218 = pneg %p51
        %p219 = pneg %p80
        %p220 = pneg %p77
        %p221 = scmp.lt.s32.totalorder %s26, 0
        %s222 = scalar_select %p221, %s26, 0
        %s223 = scalar_lea.vmem %s2, %s222
        %p224 = pneg %p106
        %p225 = pneg %p103
        %p226 = pneg %p134
        %p227 = pneg %p131
        %s228 = sand.u32 %s121, 1
        %s229 = scalar_lea.sflag [#allocation4], %s228
        %s230 = sand.u32 %s121, 1
        %s231 = smul.addr %s230, 8
        %s232 = scalar_lea.vmem [#allocation7], %s231
        %p233 = scmp.lt.s32.totalorder %s26, 0
        %s234 = scalar_select %p233, %s26, 0
        %s235 = scalar_lea.vmem %s2, %s234
        %v237 = vld [vmem:[%s203] sm:$0xff]
        %v238 = vpack.c.bf16 %v237, %v237
        %v239 = vld [vmem:[#allocation5] sm:$0xf]
        %v240 = vld [vmem:[#allocation5 + $0x4] sm:$0xf]
        %v241 = vld [vmem:[#allocation5 + $0x8] sm:$0xf]
        %v242 = vld [vmem:[#allocation5 + $0xc] sm:$0xf]
        %v243 = vld [vmem:[%s235] sm:$0x1]
        %v245 = vlaneseq
        %v246 = vshrl.u32 %v245, 7
        %v247 = vsub.s32 0, %v246
        %v248 = vrot.slane %v243, %v247
        %v254 = vunpack.c.l.b16 %v239
        %v255 = vunpack.c.l.b16 %v240
        %v256 = vunpack.c.l.b16 %v241
        %v257 = vunpack.c.l.b16 %v242
        %v258 = vpack.c.b16 %v255, %v254
        %v259 = vpack.c.b16 %v257, %v256
        %vm262 = vcmask 261120
        %v264 = vsel %vm262, %v238, 0
        %266 = vmatprep.subr.bf16.mxu0 0
        %267 = vmatpush1.bf16.msra.mxu0 %v258
        %268 = vmatprep.subr.bf16.mxu0 0
        %269 = vmatpush1.bf16.msra.mxu0 %v259
        %270 = vmatprep.subr.bf16.mxu0 0
        %271 = vmatpush1.bf16.msra.mxu0 0
        %272 = vmatprep.subr.bf16.mxu0 0
        %273 = vmatpush1.bf16.msra.mxu0 0
        %274 = vmatprep.subr.bf16.mxu0 0
        %275 = vmatpush1.bf16.msra.mxu0 0
        %276 = vmatprep.subr.bf16.mxu0 0
        %277 = vmatpush1.bf16.msra.mxu0 0
        %278 = vmatprep.subr.bf16.mxu0 0
        %279 = vmatpush1.bf16.msra.mxu0 0
        %280 = vmatprep.subr.bf16.mxu0 0
        %281 = vmatpush1.bf16.msra.mxu0 0
        %282 = vmatprep.subr.bf16.mxu0 0
        %283 = vmatpush1.bf16.msra.mxu0 0
        %284 = vmatprep.subr.bf16.mxu0 0
        %285 = vmatpush1.bf16.msra.mxu0 0
        %286 = vmatprep.subr.bf16.mxu0 0
        %287 = vmatpush1.bf16.msra.mxu0 0
        %288 = vmatprep.subr.bf16.mxu0 0
        %289 = vmatpush1.bf16.msra.mxu0 0
        %290 = vmatprep.subr.bf16.mxu0 0
        %291 = vmatpush1.bf16.msra.mxu0 0
        %292 = vmatprep.subr.bf16.mxu0 0
        %293 = vmatpush1.bf16.msra.mxu0 0
        %294 = vmatprep.subr.bf16.mxu0 0
        %295 = vmatpush1.bf16.msra.mxu0 0
        %296 = vmatprep.subr.bf16.mxu0 0
        %297 = vmatpush1.bf16.msra.mxu0 0
        %298 = vmatprep.mubr.bf16.mxu0 0
        %299 = vmatmul.mubr.bf16.gmra.mrb[0].mxu0 %v264
        %v300 = vpop.f32.mrb[0].mxu0
        %v301 = vadd.f32 %v248, %v300
        %v302 = vpop.f32.mrb[0].mxu0
        %v303 = vpop.f32.mrb[0].mxu0
        %v304 = vpop.f32.mrb[0].mxu0
        %305 = vdwg.mxu0
        %v306 = vand.u32 2147483647, %v301
        %vm307 = vcmp.le.f32.partialorder %v306, 0.7853982
        %vm308 = vcmp.lt.s32.totalorder %v301, 0
        %v309 = vand.u32 %v301, 2139095040
        %v310 = vshrl.u32 %v309, 23
        %v311 = vsub.s32 %v310, 127
        %v312 = vand.u32 2147483647, %v301
        %v313 = vand.u32 %v312, 8388607
        %v314 = vor.u32 %v313, 8388608
        %v315 = vsub.s32 0, %v314
        %v316 = vadd.s32 %v311, 1
        %vm317 = vcmp.gt.s32.totalorder %v316, 0
        %v318 = vsel %vm317, %v316, 0
        %v319 = vshrl.u32 %v318, 5
        %v320 = vand.u32 %v318, 31
        %v321 = vsub.s32 32, %v320
        %v322 = vshrl.u32 683565275, %v321
        %v323 = vshll.u32 683565275, %v320
        %v324 = vshrl.u32 2475754826, %v321
        %v325 = vor.u32 %v323, %v324
        %v326 = vshll.u32 2475754826, %v320
        %v327 = vshrl.u32 2131351028, %v321
        %v328 = vor.u32 %v326, %v327
        %v329 = vshll.u32 2131351028, %v320
        %v330 = vshrl.u32 2102212464, %v321
        %v331 = vor.u32 %v329, %v330
        %v332 = vshll.u32 2102212464, %v320
        %v333 = vshrl.u32 920167782, %v321
        %v334 = vor.u32 %v332, %v333
        %v335 = vshll.u32 920167782, %v320
        %v336 = vshrl.u32 1326507024, %v321
        %v337 = vor.u32 %v335, %v336
        %vm338 = vcmp.lt.s32.totalorder %v319, 1
        %vm339 = vcmp.lt.s32.totalorder %v319, 2
        %vm340 = vcmp.lt.s32.totalorder %v319, 3
        %vm341 = vcmp.lt.s32.totalorder %v319, 4
        %v342 = vsel %vm338, %v322, %v325
        %v343 = vsel %vm341, %v331, 2102212464
        %v344 = vsel %vm340, %v328, %v343
        %v345 = vsel %vm339, %v342, %v344
        %v346 = vsel %vm338, %v325, %v328
        %v347 = vsel %vm341, %v334, 920167782
        %v348 = vsel %vm340, %v331, %v347
        %v349 = vsel %vm339, %v346, %v348
        %v350 = vsel %vm338, %v328, %v331
        %v351 = vsel %vm341, %v337, 1326507024
        %v352 = vsel %vm340, %v334, %v351
        %v353 = vsel %vm339, %v350, %v352
        %v354 = vshll.u32 %v314, 8
        %v355 = vmul.u32.u64.compose %v354, %v353
        %v356 = vextract.low.u32 %v355
        %v357 = vextract.high.u32 %v355
        %v358 = vmul.u32.u64.compose %v354, %v349
        %v359 = vextract.low.u32 %v358
        %v360 = vextract.high.u32 %v358
        %v361 = vmul.u32 %v354, %v345
        %v362 = vadd.s32 %v357, %v359
        %vm363 = vc.u32 %v357, %v359
        %v364 = vadd.s32 %v360, 1
        %v365 = vsel %vm363, %v364, %v360
        %v366 = vadd.s32 %v361, %v365
        %v367 = vadd.s32 %v366, 536870912
        %v368 = vshrl.u32 %v367, 30
        %v369 = vshll.u32 %v368, 30
        %v370 = vsub.s32 %v366, %v369
        %vm371 = vcmp.lt.s32.totalorder %v370, 0
        %v372 = vsub.s32 0, %v370
        %v373 = vsel %vm371, %v372, %v370
        %v374 = vclz %v373
        %v375 = vsub.s32 %v374, 2
        %vm376 = vcmp.gt.s32.totalorder 0, %v375
        %v377 = vsel %vm376, 0, %v375
        %v378 = vsub.s32 32, %v377
        %v379 = vshll.u32 %v370, %v377
        %v380 = vshrl.u32 %v362, %v378
        %v381 = vor.u32 %v379, %v380
        %v382 = vsub.s32 4294967266, %v377
        %v383 = vadd.s32 %v382, 127
        %v384 = vshll.u32 %v383, 23
        %v385 = vor.u32 4788187, %v384
        %v386 = vand.u32 2147483647, %v385
        %v388 = vcvt.s32.f32 %v381
        %v389 = vmul.f32 %v388, %v386
        %v390 = vxor.u32 %v389, 2147483648
        %v391 = vsel %vm308, %v390, %v389
        %v392 = vsub.s32 4, %v368
        %v393 = vsel %vm308, %v392, %v368
        %v394 = vsel %vm307, %v301, %v391
        %v395 = vsel %vm307, 0, %v393
        %v396 = vcosq.f32.pop %v394
        %v397 = vsinq.f32.pop %v394
        %vm398 = vweird.f32 %v301
        %v399 = vadd.s32 %v395, 3
        %v400 = vand.u32 %v399, 3
        %vm401 = vcmp.lt.s32.totalorder %v400, 2
        %vm402 = vcmp.eq.s32.totalorder %v400, 0
        %v403 = vxor.u32 %v397, 2147483648
        %v404 = vsel %vm402, %v396, %v403
        %vm405 = vcmp.eq.s32.totalorder %v400, 2
        %v406 = vxor.u32 %v396, 2147483648
        %v407 = vsel %vm405, %v406, %v397
        %v408 = vsel %vm401, %v404, %v407
        %v409 = vsel %vm398, nan, %v408
        %410 = vst [vmem:[%s232] sm:$0xff] %v409
        %s411 = sand.u32 %s121, 1
        %s412 = scalar_lea.sflag [#allocation4], %s411
        %s413 = sand.u32 %s121, 1
        %s414 = smul.addr %s413, 8
        %s415 = scalar_lea.vmem [#allocation7], %s414
        // Predicated region
        $region41: #{tpu_custom_call.1} parent=31 // pred_check
          %p416 = pneg %p131
        $region42: #{tpu_custom_call.1} parent=31 // pred_check_branch
          %418 = sbr.rel (%p416) target = $region44
        $region43: #{tpu_custom_call.1} parent=31 // pred_region
          %s420 = ssub.s32 128, 128
          %421 = vsyncadd %s412, %s420
          %s422 = sadd.s32 %s26, %s25
          %s423 = smul.addr %s422, 128
          %s424 = scalar_lea.hbm %s3, %s423
          %s426 = sshll.u32 %s415, 4
          %s427 = int_to_ptr.vmem [resolvable:$true] %s426
          %429 = dma.vmem_to_hbm [thread:$0]  %s427, 128, %s424, %s412
        $region44: #{tpu_custom_call.1} parent=31 // pred_fallthru
          _
      $region32: #{tpu_custom_call.1} parent=5 // pred_fallthru
        _
      %p430 = scmp.le.s32.totalorder 2, %s16
      // Predicated region
      $region45: #{tpu_custom_call.1} parent=5 // pred_check
        %p431 = pneg %p430
      $region46: #{tpu_custom_call.1} parent=5 // pred_check_branch
        %433 = sbr.rel (%p431) target = $region48
      $region47: #{tpu_custom_call.1} parent=5 // pred_region
        %s434 = ssub.s32 %s16, 2
        // Predicated region
        $region49: #{tpu_custom_call.1} parent=47 // pred_check
          %p435 = pneg %p137
        $region50: #{tpu_custom_call.1} parent=47 // pred_check_branch
          %437 = sbr.rel (%p435) target = $region52
        $region51: #{tpu_custom_call.1} parent=47 // pred_region
          %s438 = sand.u32 %s122, 1
          %s439 = scalar_lea.sflag [#allocation4], %s438
          %s440 = sand.u32 %s122, 1
          %s441 = smul.addr %s440, 8
          %s442 = scalar_lea.vmem [#allocation7], %s441
          %443 = dma.done %s439, 128
        $region52: #{tpu_custom_call.1} parent=47 // pred_fallthru
          _
      $region48: #{tpu_custom_call.1} parent=5 // pred_fallthru
        _
    $region6: #{tpu_custom_call.1} parent=1 // loop_footer
      %s20 = sadd.s32 1, %s16
    $region7: #{tpu_custom_call.1} parent=1 // loop_footer_branch
      %15 = sbr.rel target = $region3
    $region8: #{tpu_custom_call.1} parent=1 // loop_exit
      _
    %444 = vsyncpa [#allocation3], 1
    %s445 = scalar_lea.sflag [#allocation3], 1
    %446 = vsyncpa %s445, 1
    %447 = vsyncpa [#allocation6], 1
    %448 = vsyncpa [#allocation4], 1
    %s449 = scalar_lea.sflag [#allocation4], 1
    %450 = vsyncpa %s449, 1

</llo_original>
